<compile_context>
chip_gen: v5e
topology: v5e:2x2
jax: 0.10.0
libtpu: 0.0.40
codegen_flags: <defaults>
</compile_context>

<pallas_src>
import functools

import jax
import jax.numpy as jnp
from jax import lax
from jax.experimental import pallas as pl
from jax.experimental.pallas import tpu as pltpu


def _round_up(x, m):
    return ((x + m - 1) // m) * m


def _tfidf_proj_kernel(x_ref, idf_ref, w_ref, b_ref, emb_ref):
    """Grid = (batch tiles [parallel], vocab tiles [arbitrary reduction]).

    x_ref   [bb, bv] f32   tf vectors
    idf_ref [1,  bv] f32   idf vector (sublane-broadcast over bb)
    w_ref   [D,  bv] bf16  Linear weight, native PyTorch [D, V] layout (lane-dense)
    b_ref   [1,  D ] f32   Linear bias
    emb_ref [bb, D ] f32   output; resident across the vocab axis -> accumulator
    """
    k = pl.program_id(1)

    # tf * idf (VPU, broadcast [1, bv] over [bb, bv]); cast to the weight's
    # stream dtype so the MXU runs a native bf16 matmul with f32 accumulation.
    tfidf = (x_ref[...] * idf_ref[...]).astype(w_ref.dtype)          # [bb, bv]
    # Contract the shared vocab (lane) axis: [bb, bv] . [D, bv] -> [bb, D].
    part = lax.dot_general(
        tfidf, w_ref[...],
        dimension_numbers=(((1,), (1,)), ((), ())),
        preferred_element_type=jnp.float32)

    @pl.when(k == 0)
    def _first():
        # Fold the bias into the first reduction step: no separate zero-init
        # pass and no finalize branch.
        emb_ref[...] = part + b_ref[...]                              # [bb,D]+[1,D]

    @pl.when(k != 0)
    def _rest():
        emb_ref[...] += part


@functools.partial(jax.jit, static_argnames=("block_v", "weight_dtype"))
def idf_vectorizer_forward(tf_vectors, idf_vector, proj_weight, proj_bias,
                           block_v=2048, weight_dtype=jnp.bfloat16):
    """tf_vectors [B, V] f32, idf_vector [V] f32,
    proj_weight [D, V] f32 (PyTorch Linear layout, NOT transposed), proj_bias [D] f32.
    Returns (embedding [B, 1, D] f32, padding_mask [B, 1, 1, 1] f32)."""
    B, V = tf_vectors.shape
    D, V_w = proj_weight.shape
    assert V_w == V, "proj_weight must be [d_model, vocab_size]"

    w_bytes = jnp.dtype(weight_dtype).itemsize

    # ---- batch tiling (parallel grid axis; feeds the 2nd v7x TensorCore at large B)
    if B <= 256:
        block_b = B                       # full-dim block: no (8,128) constraint
        B_pad = B
    else:
        block_b = 256
        B_pad = _round_up(B, block_b)

    # ---- generation-aware VMEM budget (64 MiB/core on v7x, 128 MiB on v5e/v6e)
    try:
        info = pltpu.get_tpu_info()
        vmem_cap = int(getattr(info, "vmem_capacity_bytes", 64 * 1024 * 1024))
    except Exception:
        vmem_cap = 64 * 1024 * 1024       # conservative v7x floor
    vmem_limit = int(min(vmem_cap // 2, 64 * 1024 * 1024))
    stream_budget = int(min(vmem_cap // 4, 24 * 1024 * 1024))

    # ---- vocab tiling (reduction axis): as large as the budget allows.
    bv = min(_round_up(max(block_v, 128), 128), _round_up(V, 128))
    while bv > 128:
        # double-buffered streamed tiles: x (f32) + W (bf16) + idf (f32)
        streamed = 2 * (block_b * bv * 4 + D * bv * w_bytes + bv * 4)
        if streamed <= stream_budget:
            break
        bv = max(128, (bv // 2 // 128) * 128)
    block_v = bv
    V_pad = _round_up(V, block_v)

    # ---- zero-pad to tile multiples (padded vocab columns / batch rows contribute 0)
    x = tf_vectors.astype(jnp.float32)
    idf = idf_vector.astype(jnp.float32)
    w = proj_weight
    if V_pad != V:
        x = jnp.pad(x, ((0, 0), (0, V_pad - V)))
        idf = jnp.pad(idf, (0, V_pad - V))
        w = jnp.pad(w, ((0, 0), (0, V_pad - V)))
    if B_pad != B:
        x = jnp.pad(x, ((0, B_pad - B), (0, 0)))

    idf2 = idf.reshape(1, V_pad)
    w = w.astype(weight_dtype)                       # [D, V_pad], lane-dense stream
    b2 = proj_bias.astype(jnp.float32).reshape(1, D)

    grid = (B_pad // block_b, V_pad // block_v)

    emb = pl.pallas_call(
        _tfidf_proj_kernel,
        out_shape=jax.ShapeDtypeStruct((B_pad, D), jnp.float32),
        grid_spec=pltpu.PrefetchScalarGridSpec(
            num_scalar_prefetch=0,
            grid=grid,
            in_specs=[
                pl.BlockSpec((block_b, block_v), lambda i, k: (i, k)),   # tf vectors
                pl.BlockSpec((1, block_v), lambda i, k: (0, k)),         # idf
                pl.BlockSpec((D, block_v), lambda i, k: (0, k)),         # W [D, V]
                pl.BlockSpec((1, D), lambda i, k: (0, 0)),               # bias
            ],
            out_specs=pl.BlockSpec((block_b, D), lambda i, k: (i, 0)),   # resident acc
        ),
        compiler_params=pltpu.CompilerParams(
            dimension_semantics=("parallel", "arbitrary"),
            vmem_limit_bytes=vmem_limit,
        ),
    )(x, idf2, w, b2)

    emb = emb[:B]
    embedding = emb.reshape(B, 1, D)                 # unsqueeze(1)

    # generate_padding_mask(embedding, padding_idx=0):
    #   mask = (sum(emb, -1) == 0) * -10e4   (post-bias sum, exact-zero test,
    #   matching the literal PyTorch reference). Trivial row-sum -> done in glue
    #   to keep the kernel's stores lane-dense.
    s = jnp.sum(embedding, axis=-1)                  # [B, 1]
    padding_mask = jnp.where(s == 0.0, jnp.float32(-10e4), jnp.float32(0.0))
    padding_mask = padding_mask.reshape(B, 1, 1, 1)
    return embedding, padding_mask


def build_tf_vectors(token_ids, vocab_size):
    """Plain-JAX glue: tf_vector[b, w] = count(w in doc b) / num_tokens(doc b).
    Scatter-add (no [B, T, V] one-hot intermediate)."""
    B, T = token_ids.shape
    counts = jnp.zeros((B, vocab_size), jnp.float32)
    counts = counts.at[jnp.arange(B)[:, None], token_ids].add(1.0)
    return counts / jnp.float32(T)


def _reference(tf_vectors, idf_vector, proj_weight, proj_bias):
    B = tf_vectors.shape[0]
    emb = ((tf_vectors * idf_vector[None, :]) @ proj_weight.T + proj_bias)[:, None, :]
    mask = jnp.where(jnp.sum(emb, axis=-1) == 0.0, -10e4, 0.0).reshape(B, 1, 1, 1)
    return emb, mask


if __name__ == "__main__":
    key = jax.random.PRNGKey(0)
    k_w, k_b, k_tok = jax.random.split(key, 3)

    VOCAB_SIZE = 256      # vocab.vocab_size()
    D_MODEL = 32          # config['text_embedding']['d_model']
    BATCH = 2
    SEQ = 8               # tokens per "document"

    # Deterministic synthetic idf vector: idf[i] = log(N_docs / doc_count[i]).
    doc_counts = (jnp.arange(VOCAB_SIZE) % 7 + 1).astype(jnp.float32)
    idf_vector = jnp.log(jnp.float32(VOCAB_SIZE) / doc_counts)

    # nn.Linear(VOCAB_SIZE, D_MODEL) parameters (deterministic init).
    proj_weight = jax.random.normal(k_w, (D_MODEL, VOCAB_SIZE), jnp.float32) * 0.02
    proj_bias = jax.random.normal(k_b, (D_MODEL,), jnp.float32) * 0.02

    # Pre-tokenized inputs (stand-in for input_texts after vocab lookup).
    token_ids = jax.random.randint(k_tok, (BATCH, SEQ), 0, VOCAB_SIZE)
    tf_vectors = build_tf_vectors(token_ids, VOCAB_SIZE)   # [B, V]

    embedding, padding_mask = idf_vectorizer_forward(
        tf_vectors, idf_vector, proj_weight, proj_bias)
    jax.block_until_ready((embedding, padding_mask))

    ref_emb, ref_mask = _reference(tf_vectors, idf_vector, proj_weight, proj_bias)
    assert embedding.shape == (BATCH, 1, D_MODEL)
    assert padding_mask.shape == (BATCH, 1, 1, 1)
    # bf16 weight stream -> relaxed tolerance vs f32 reference.
    assert jnp.allclose(embedding, ref_emb, atol=1e-2, rtol=1e-2)
    assert jnp.allclose(padding_mask, ref_mask)

    # Second case: vocab size NOT a multiple of the tile (exercises V padding).
    V2 = 200
    idf2 = jnp.log(jnp.float32(V2) / ((jnp.arange(V2) % 5 + 1).astype(jnp.float32)))
    w2 = jax.random.normal(k_w, (D_MODEL, V2), jnp.float32) * 0.02
    tok2 = jax.random.randint(k_tok, (BATCH, SEQ), 0, V2)
    tf2 = build_tf_vectors(tok2, V2)
    emb2, mask2 = idf_vectorizer_forward(tf2, idf2, w2, proj_bias)
    jax.block_until_ready((emb2, mask2))
    ref_emb2, ref_mask2 = _reference(tf2, idf2, w2, proj_bias)
    assert emb2.shape == (BATCH, 1, D_MODEL)
    assert mask2.shape == (BATCH, 1, 1, 1)
    assert jnp.allclose(emb2, ref_emb2, atol=1e-2, rtol=1e-2)
    assert jnp.allclose(mask2, ref_mask2)

    # Third case: vocab large enough to force multiple reduction steps
    # (exercises the k==0 bias-fold + k!=0 accumulate paths with grid_k > 1).
    V3 = 4096 + 128
    idf3 = jnp.log(jnp.float32(V3) / ((jnp.arange(V3) % 9 + 1).astype(jnp.float32)))
    w3 = jax.random.normal(k_w, (D_MODEL, V3), jnp.float32) * 0.02
    tok3 = jax.random.randint(k_tok, (BATCH, SEQ), 0, V3)
    tf3 = build_tf_vectors(tok3, V3)
    emb3, mask3 = idf_vectorizer_forward(tf3, idf3, w3, proj_bias, block_v=2048)
    jax.block_until_ready((emb3, mask3))
    ref_emb3, ref_mask3 = _reference(tf3, idf3, w3, proj_bias)
    assert jnp.allclose(emb3, ref_emb3, atol=1e-2, rtol=1e-2)
    assert jnp.allclose(mask3, ref_mask3)

    print("KERNEL_OK")
</pallas_src>

<mosaic_0001>
module attributes {stable_mosaic.version = 11 : i64} {
  func.func @_tfidf_proj_kernel(%arg0: i32, %arg1: i32, %arg2: memref<2x256xf32, #tpu.memory_space<vmem>>, %arg3: memref<1x256xf32, #tpu.memory_space<vmem>>, %arg4: memref<32x256xbf16, #tpu.memory_space<vmem>>, %arg5: memref<1x32xf32, #tpu.memory_space<vmem>>, %arg6: memref<2x32xf32, #tpu.memory_space<vmem>>) attributes {dimension_semantics = [#tpu.dimension_semantics<parallel>, #tpu.dimension_semantics<arbitrary>], iteration_bounds = array<i64: 1, 1>, scalar_prefetch = 0 : i64, scratch_operands = 0 : i64, tpu.core_type = #tpu.core_type<tc>, window_params = [{transform_indices = @transform_0, window_bounds = array<i64: 2, 256>}, {transform_indices = @transform_1, window_bounds = array<i64: 1, 256>}, {transform_indices = @transform_2, window_bounds = array<i64: 32, 256>}, {pipeline_mode = #tpu.pipeline_mode<synchronous>, transform_indices = @transform_3, window_bounds = array<i64: 1, 32>}, {transform_indices = @transform_4, window_bounds = array<i64: 2, 32>}]} {
    %c0 = arith.constant 0 : index
    %c0_0 = arith.constant 0 : index
    %0 = vector.load %arg2[%c0, %c0_0] : memref<2x256xf32, #tpu.memory_space<vmem>>, vector<2x256xf32>
    %c0_1 = arith.constant 0 : index
    %c0_2 = arith.constant 0 : index
    %1 = vector.load %arg3[%c0_1, %c0_2] : memref<1x256xf32, #tpu.memory_space<vmem>>, vector<1x256xf32>
    %2 = vector.broadcast %1 : vector<1x256xf32> to vector<2x256xf32>
    %3 = arith.mulf %0, %2 : vector<2x256xf32>
    %4 = arith.truncf %3 : vector<2x256xf32> to vector<2x256xbf16>
    %c0_3 = arith.constant 0 : index
    %c0_4 = arith.constant 0 : index
    %5 = vector.load %arg4[%c0_3, %c0_4] : memref<32x256xbf16, #tpu.memory_space<vmem>>, vector<32x256xbf16>
    %cst = arith.constant dense<0.000000e+00> : vector<2x32xf32>
    %6 = tpu.matmul %4, %5, %cst {dimension_numbers = #tpu.dot_dimension_numbers<[1], [1], [0], [0], [0, 0, 1, 0], [], []>} : vector<2x256xbf16>, vector<32x256xbf16>, vector<2x32xf32> -> vector<2x32xf32>
    %c0_i32 = arith.constant 0 : i32
    %7 = arith.cmpi eq, %arg1, %c0_i32 : i32
    %8 = arith.extui %7 : i1 to i32
    %c0_i32_5 = arith.constant 0 : i32
    %9 = arith.cmpi ne, %8, %c0_i32_5 : i32
    scf.if %9 {
      %c0_8 = arith.constant 0 : index
      %c0_9 = arith.constant 0 : index
      %13 = vector.load %arg5[%c0_8, %c0_9] : memref<1x32xf32, #tpu.memory_space<vmem>>, vector<1x32xf32>
      %14 = vector.broadcast %13 : vector<1x32xf32> to vector<2x32xf32>
      %15 = arith.addf %6, %14 : vector<2x32xf32>
      %c0_10 = arith.constant 0 : index
      %c0_11 = arith.constant 0 : index
      %16 = vector.load %arg6[%c0_10, %c0_11] : memref<2x32xf32, #tpu.memory_space<vmem>>, vector<2x32xf32>
      tpu.vector_store %arg6[%c0_10, %c0_11], %15 {strides = array<i32>} : memref<2x32xf32, #tpu.memory_space<vmem>>, vector<2x32xf32>,
    } else {
    }
    %c0_i32_6 = arith.constant 0 : i32
    %10 = arith.cmpi ne, %arg1, %c0_i32_6 : i32
    %11 = arith.extui %10 : i1 to i32
    %c0_i32_7 = arith.constant 0 : i32
    %12 = arith.cmpi ne, %11, %c0_i32_7 : i32
    scf.if %12 {
      %c0_8 = arith.constant 0 : index
      %c0_9 = arith.constant 0 : index
      %13 = vector.load %arg6[%c0_8, %c0_9] : memref<2x32xf32, #tpu.memory_space<vmem>>, vector<2x32xf32>
      %14 = arith.addf %13, %6 : vector<2x32xf32>
      %c0_10 = arith.constant 0 : index
      %c0_11 = arith.constant 0 : index
      %15 = vector.load %arg6[%c0_10, %c0_11] : memref<2x32xf32, #tpu.memory_space<vmem>>, vector<2x32xf32>
      tpu.vector_store %arg6[%c0_10, %c0_11], %14 {strides = array<i32>} : memref<2x32xf32, #tpu.memory_space<vmem>>, vector<2x32xf32>,
    } else {
    }
    return
  }
  func.func @transform_0(%arg0: i32, %arg1: i32) -> (i32, i32) {
    %c0_i32 = arith.constant 0 : i32
    return %arg0, %arg1 : i32, i32
  }
  func.func @transform_1(%arg0: i32, %arg1: i32) -> (i32, i32) {
    %c0_i32 = arith.constant 0 : i32
    %c0_i32_0 = arith.constant 0 : i32
    return %c0_i32, %arg1 : i32, i32
  }
  func.func @transform_2(%arg0: i32, %arg1: i32) -> (i32, i32) {
    %c0_i32 = arith.constant 0 : i32
    %c0_i32_0 = arith.constant 0 : i32
    return %c0_i32, %arg1 : i32, i32
  }
  func.func @transform_3(%arg0: i32, %arg1: i32) -> (i32, i32) {
    %c0_i32 = arith.constant 0 : i32
    %c0_i32_0 = arith.constant 0 : i32
    %c0_i32_1 = arith.constant 0 : i32
    return %c0_i32, %c0_i32_0 : i32, i32
  }
  func.func @transform_4(%arg0: i32, %arg1: i32) -> (i32, i32) {
    %c0_i32 = arith.constant 0 : i32
    %c0_i32_0 = arith.constant 0 : i32
    return %arg0, %c0_i32 : i32, i32
  }
}

</mosaic_0001>

<llo_original>
// kernel: idf_vectorizer_forward.1
$region0: #{idf_vectorizer_forward.1}
  #allocation0 [shape = 'u32[]', space=smem, size = 0x4, offset = 0x4, fixed_abs, tag = 'smem constant byte address 0x4 - core index']
  #allocation1 [shape = 'u32[72,128]{1,0:T(1,128)}', space=vmem, size = 0x9000, scoped, tag = 'internal scratch']
  %s0 = inlined_call_operand.vmem [shape: f32[2,256], index: 0, kind: input, shape index: {}]
  %s1 = inlined_call_operand.vmem [shape: f32[1,256], index: 1, kind: input, shape index: {}]
  %s2 = inlined_call_operand.vmem [shape: bf16[32,256], index: 2, kind: input, shape index: {}]
  %s3 = inlined_call_operand.vmem [shape: f32[1,32], index: 3, kind: input, shape index: {}]
  %s4 = inlined_call_operand.vmem [shape: f32[2,32], index: 4, kind: output, shape index: {}]
  %s5 = sld [smem:[#allocation0]]
  $region34: #{idf_vectorizer_forward.1} parent=0
    _
  %s7 = ssub.s32 1, %s5
  %s8 = scalar_select 0, %s7, %s5
  // Predicated region
  $region2: #{idf_vectorizer_forward.1} parent=0 // pred_check
    _
  $region3: #{idf_vectorizer_forward.1} parent=0 // pred_check_branch
    %10 = sbr.rel (0) target = $region5
  $region4: #{idf_vectorizer_forward.1} parent=0 // pred_region
    _
  $region5: #{idf_vectorizer_forward.1} parent=0 // pred_fallthru
    _
  // Predicated region
  $region6: #{idf_vectorizer_forward.1} parent=0 // pred_check
    _
  $region7: #{idf_vectorizer_forward.1} parent=0 // pred_check_branch
    %12 = sbr.rel (0) target = $region9
  $region8: #{idf_vectorizer_forward.1} parent=0 // pred_region
    _
  $region9: #{idf_vectorizer_forward.1} parent=0 // pred_fallthru
    _
  // Predicated region
  $region10: #{idf_vectorizer_forward.1} parent=0 // pred_check
    _
  $region11: #{idf_vectorizer_forward.1} parent=0 // pred_check_branch
    %14 = sbr.rel (0) target = $region13
  $region12: #{idf_vectorizer_forward.1} parent=0 // pred_region
    _
  $region13: #{idf_vectorizer_forward.1} parent=0 // pred_fallthru
    _
  // Predicated region
  $region14: #{idf_vectorizer_forward.1} parent=0 // pred_check
    _
  $region15: #{idf_vectorizer_forward.1} parent=0 // pred_check_branch
    %16 = sbr.rel (0) target = $region17
  $region16: #{idf_vectorizer_forward.1} parent=0 // pred_region
    _
  $region17: #{idf_vectorizer_forward.1} parent=0 // pred_fallthru
    _
  %v18 = vld [vmem:[%s0] sm:$0xf]
  %v19 = vld [vmem:[%s1] sm:$0x3]
  %v21 = vperm.slane %v19, 0
  %v22 = vperm.slane %v19, 1
  %v23 = vrot.slane %v22, 6
  %vm24 = vcmask 1041408
  %v25 = vsel %vm24, %v21, %v23
  %v27 = vmul.f32 %v18, %v25
  %29 = vst [vmem:[#allocation1] ss:$4 sm:$0xff] %v27
  %v30 = vld.sshfl [vmem:[#allocation1] sm:$0xff pattern:$0x73625140]
  %v31 = vld.sshfl [vmem:[#allocation1 + $0x8] sm:$0xff pattern:$0x73625140]
  %v34 = vpack.c.bf16 %v30, %v30
  %v35 = vpack.c.bf16 %v31, %v31
  %v36 = vld [vmem:[%s2] sm:$0xff]
  %v37 = vld [vmem:[%s2 + $0x8] sm:$0xff]
  %v38 = vld [vmem:[%s2 + $0x10] sm:$0xff]
  %v39 = vld [vmem:[%s2 + $0x18] sm:$0xff]
  %v44 = vunpack.c.l.b16 %v36
  %v45 = vunpack.c.h.b16 %v36
  %v46 = vunpack.c.l.b16 %v37
  %v47 = vunpack.c.h.b16 %v37
  %v48 = vunpack.c.l.b16 %v38
  %v49 = vunpack.c.h.b16 %v38
  %v50 = vunpack.c.l.b16 %v39
  %v51 = vunpack.c.h.b16 %v39
  %v52 = vpack.c.b16 %v46, %v44
  %v53 = vpack.c.b16 %v47, %v45
  %v54 = vpack.c.b16 %v50, %v48
  %v55 = vpack.c.b16 %v51, %v49
  %60 = vmatpush.bf16.xpose.msra.mxu0 0
  %61 = vmatpush.bf16.xpose.msra.mxu0 0
  %62 = vmatpush.bf16.xpose.msra.mxu0 0
  %63 = vmatpush.bf16.xpose.msra.mxu0 0
  %64 = vmatpush.bf16.xpose.msra.mxu0 0
  %65 = vmatpush.bf16.xpose.msra.mxu0 0
  %66 = vmatpush.bf16.xpose.msra.mxu0 %v54
  %67 = vmatpush.bf16.xpose.msra.mxu0 %v52
  %68 = vmatmul.bf16.gmra.mxu0 %v34
  %v69 = vpop.f32.mrf.mxu0
  %v70 = vadd.f32 0.0, %v69
  %v71 = vpop.f32.mrf.mxu0
  %72 = vdwg.mxu0
  %73 = vmatpush.bf16.xpose.msra.mxu0 0
  %74 = vmatpush.bf16.xpose.msra.mxu0 0
  %75 = vmatpush.bf16.xpose.msra.mxu0 0
  %76 = vmatpush.bf16.xpose.msra.mxu0 0
  %77 = vmatpush.bf16.xpose.msra.mxu0 0
  %78 = vmatpush.bf16.xpose.msra.mxu0 0
  %79 = vmatpush.bf16.xpose.msra.mxu0 %v55
  %80 = vmatpush.bf16.xpose.msra.mxu0 %v53
  %81 = vmatmul.bf16.gmra.mxu0 %v35
  %v82 = vpop.f32.mrf.mxu0
  %v83 = vadd.f32 %v70, %v82
  %v84 = vpop.f32.mrf.mxu0
  %85 = vdwg.mxu0
  %p86 = scmp.eq.s32.totalorder 0, 0
  // Predicated region
  $region18: #{idf_vectorizer_forward.1} parent=0 // pred_check
    %p87 = pneg %p86
  $region19: #{idf_vectorizer_forward.1} parent=0 // pred_check_branch
    %89 = sbr.rel (%p87) target = $region21
  $region20: #{idf_vectorizer_forward.1} parent=0 // pred_region
    %v90 = vld [vmem:[%s3] sm:$0x1]
    %v92 = vperm.slane %v90, 0
    %v94 = vadd.f32 %v83, %v92
    %vm95 = vcmask 254976
    %96 = vst.msk [vmem:[%s4] sm:$0x3] %vm95, %v94
  $region21: #{idf_vectorizer_forward.1} parent=0 // pred_fallthru
    _
  %p97 = scmp.ne.s32.totalorder 0, 0
  // Predicated region
  $region22: #{idf_vectorizer_forward.1} parent=0 // pred_check
    %p98 = pneg %p97
  $region23: #{idf_vectorizer_forward.1} parent=0 // pred_check_branch
    %100 = sbr.rel (%p98) target = $region25
  $region24: #{idf_vectorizer_forward.1} parent=0 // pred_region
    %v101 = vld [vmem:[%s4] sm:$0x3]
    %v102 = vadd.f32 %v101, %v83
    %vm103 = vcmask 254976
    %104 = vst.msk [vmem:[%s4] sm:$0x3] %vm103, %v102
  $region25: #{idf_vectorizer_forward.1} parent=0 // pred_fallthru
    _
  // Predicated region
  $region26: #{idf_vectorizer_forward.1} parent=0 // pred_check
    _
  $region27: #{idf_vectorizer_forward.1} parent=0 // pred_check_branch
    %106 = sbr.rel (0) target = $region29
  $region28: #{idf_vectorizer_forward.1} parent=0 // pred_region
    _
  $region29: #{idf_vectorizer_forward.1} parent=0 // pred_fallthru
    _
  // Predicated region
  $region30: #{idf_vectorizer_forward.1} parent=0 // pred_check
    _
  $region31: #{idf_vectorizer_forward.1} parent=0 // pred_check_branch
    %108 = sbr.rel (0) target = $region33
  $region32: #{idf_vectorizer_forward.1} parent=0 // pred_region
    _
  $region33: #{idf_vectorizer_forward.1} parent=0 // pred_fallthru
    _

</llo_original>
